<compile_context>
chip_gen: v7x
topology: tpu7x:2x2x1
jax: 0.10.0
libtpu: 0.0.40
codegen_flags: <defaults>
</compile_context>

<pallas_src>
import functools

import jax
import jax.numpy as jnp
from jax.experimental import pallas as pl
from jax.experimental.pallas import tpu as pltpu


def _round_up(x, m):
    return ((x + m - 1) // m) * m


def _cdiv(a, b):
    return -(-a // b)


def _vmem_capacity_bytes():
    """Generation-aware VMEM capacity; falls back to a v7x-safe 64 MiB."""
    try:
        info = pltpu.get_tpu_info()
        cap = int(getattr(info, "vmem_capacity_bytes", 0) or 0)
        if cap > 0:
            return cap
    except Exception:
        pass
    return 64 * 1024 * 1024


def _focal_loss_kernel(*refs, gamma, use_alpha, last_total, block_last, j_per):
    if use_alpha:
        x_ref, t_ref, alpha_ref, out_ref = refs
    else:
        x_ref, t_ref, out_ref = refs
        alpha_ref = None

    j = pl.program_id(2)

    # Output block is resident across the (arbitrary) j axis: init once per
    # (batch row, pixel chunk), accumulate elementwise, auto-writeback after.
    @pl.when(j == 0)
    def _():
        out_ref[...] = jnp.zeros_like(out_ref)

    x = x_ref[0].astype(jnp.float32)    # (C, S, TL): classes lead, pixels dense
    t = t_ref[0]                        # (1, S, TL) int32 target class

    # log-softmax pieces over the class (leading) axis -> pure VPU reductions.
    m = jnp.max(x, axis=0, keepdims=True)                       # (1, S, TL)
    z = x - m
    ez = jnp.exp(z)                                             # (C, S, TL)
    sumexp = jnp.sum(ez, axis=0, keepdims=True)                 # (1, S, TL)
    lse = jnp.log(sumexp)

    # gather(1, targets) via one-hot select along the class axis.
    cls = jax.lax.broadcasted_iota(jnp.int32, x.shape, 0)       # (C, S, TL)
    onehot = cls == t
    z_t = jnp.sum(jnp.where(onehot, z, 0.0), axis=0, keepdims=True)
    ez_t = jnp.sum(jnp.where(onehot, ez, 0.0), axis=0, keepdims=True)

    logpt = z_t - lse                                           # log p_t
    pt = ez_t / sumexp        # == exp(logpt); reuses exp(z) (saves one EUP exp)

    if use_alpha:
        at = jnp.sum(jnp.where(onehot, alpha_ref[...].astype(jnp.float32), 0.0),
                     axis=0, keepdims=True)
        logpt = logpt * at

    # Focal modulation (1 - pt) ** gamma, specialized for the common cases.
    if gamma == 0.0:
        loss = -logpt
    else:
        omp = 1.0 - pt
        if float(gamma).is_integer() and 0 < gamma <= 8:
            w = omp
            for _ in range(int(gamma) - 1):
                w = w * omp
        else:
            w = omp ** jnp.float32(gamma)
        loss = -(w * logpt)

    # Mask lanes past the real pixel range (partial last tile / phantom tiles
    # from the parallel pixel-chunk split).  Keep this a select, NOT a multiply,
    # so NaN/inf from out-of-bounds garbage cannot propagate.
    global_tile = pl.program_id(1) * j_per + j
    col = global_tile * block_last + jax.lax.broadcasted_iota(
        jnp.int32, loss.shape, loss.ndim - 1)
    loss = jnp.where(col < last_total, loss, 0.0)

    out_ref[...] += loss[None]          # (1, 1, S, TL), pure VPU accumulation


def focal_loss(inputs, targets, *, gamma=0.0, alpha=None, size_average=True,
               tile_pixels=None, vmem_budget_bytes=None):
    """Pallas TPU implementation of FocalLoss.forward.

    inputs:  (N, C, H, W) / (N, C, ...) float logits, or 2-D (rows, C)
    targets: matching (N, H, W) / (N, ...) / (rows,) int class indices
    alpha:   optional (C,) per-class weights
    returns: scalar float32 loss (mean if size_average else sum)
    """
    inputs = jnp.asarray(inputs)
    targets = jnp.asarray(targets)

    if inputs.ndim > 2:
        n, c = inputs.shape[0], inputs.shape[1]
        x3 = inputs.reshape(n, c, -1)          # pure view, no HBM transpose
    else:
        # 2-D (rows, classes): small transpose so pixels land on the lane axis.
        r, c = inputs.shape
        x3 = inputs.T.reshape(1, c, r)
        n = 1
    p = x3.shape[2]

    # Sublane-dense pixel layout: 8 pixels per lane column when possible.
    if p % 8 == 0 and p >= 8:
        srows, p_last = 8, p // 8
    else:
        srows, p_last = 1, p                   # rare ragged fallback

    x4 = x3.reshape(n, c, srows, p_last)
    t4 = targets.reshape(n, 1, p).astype(jnp.int32).reshape(n, 1, srows, p_last)

    use_alpha = alpha is not None

    # --- Generation-aware tile sizing (amortize ~0.35us/step grid overhead) ---
    # Per-pixel VMEM: double-buffered logits + targets, resident out block, and
    # an allowance for the in-kernel f32 temporaries (x, exp(z), per-pixel vecs).
    # TODO(synk): vocab-sized C needs an online-softmax variant that tiles the
    # class axis; this kernel keeps the full class axis resident per block.
    x_itemsize = x4.dtype.itemsize
    bytes_per_pixel = (2 * c * x_itemsize      # logits, double-buffered
                       + 2 * 4                 # int32 targets, double-buffered
                       + 4                     # resident f32 output accumulator
                       + 3 * c * 4 + 32)       # in-kernel f32 temporaries
    vmem_cap = _vmem_capacity_bytes()
    budget = vmem_budget_bytes if vmem_budget_bytes is not None else vmem_cap // 4

    if tile_pixels is not None:
        tl = max(128, _round_up(max(1, int(tile_pixels) // srows), 128))
    else:
        tl = budget // (srows * bytes_per_pixel)
        tl = max(128, (tl // 128) * 128)
    tl = min(tl, _round_up(p_last, 128))

    num_j = _cdiv(p_last, tl)
    n_par = 2 if num_j >= 2 else 1   # second parallel axis: keeps both v7x TCs busy
    j_per = _cdiv(num_j, n_par)
    grid = (n, n_par, j_per)
    max_blk = num_j - 1

    kernel = functools.partial(
        _focal_loss_kernel,
        gamma=float(gamma),
        use_alpha=use_alpha,
        last_total=p_last,
        block_last=tl,
        j_per=j_per,
    )

    def x_idx(i, k, j):
        # Clamp phantom tiles (n_par * j_per may exceed num_j); they are fully
        # masked in-kernel so re-reading the last valid block is harmless.
        return (i, 0, 0, jnp.minimum(k * j_per + j, max_blk))

    def t_idx(i, k, j):
        return (i, 0, 0, jnp.minimum(k * j_per + j, max_blk))

    in_specs = [
        pl.BlockSpec((1, c, srows, tl), x_idx),   # logits tile (classes lead)
        pl.BlockSpec((1, 1, srows, tl), t_idx),   # targets tile (lane-dense)
    ]
    args = [x4, t4]
    if use_alpha:
        alpha_arr = jnp.asarray(alpha, dtype=jnp.float32).reshape(c, 1, 1)
        in_specs.append(pl.BlockSpec((c, 1, 1), lambda i, k, j: (0, 0, 0)))
        args.append(alpha_arr)

    vmem_limit = int(max(32 * 1024 * 1024, (vmem_cap * 3) // 4))

    partials = pl.pallas_call(
        kernel,
        out_shape=jax.ShapeDtypeStruct((n, n_par, srows, tl), jnp.float32),
        grid_spec=pltpu.PrefetchScalarGridSpec(
            num_scalar_prefetch=0,
            grid=grid,
            in_specs=in_specs,
            # Distinct lane-dense partial-sum block per (batch row, pixel chunk)
            # so both leading grid axes can be split across TensorCores.
            out_specs=pl.BlockSpec((1, 1, srows, tl),
                                   lambda i, k, j: (i, k, 0, 0)),
        ),
        compiler_params=pltpu.CompilerParams(
            dimension_semantics=("parallel", "parallel", "arbitrary"),
            vmem_limit_bytes=vmem_limit),
    )(*args)

    total = jnp.sum(partials)            # masked / phantom lanes are exact zeros
    if size_average:
        total = total / jnp.float32(n * p)
    return total


def _reference_focal_loss(inputs, targets, *, gamma, alpha, size_average):
    if inputs.ndim > 2:
        n, c = inputs.shape[0], inputs.shape[1]
        x = inputs.reshape(n, c, -1).transpose(0, 2, 1).reshape(-1, c)
    else:
        x = inputs
    t = targets.reshape(-1)
    logp = jax.nn.log_softmax(x.astype(jnp.float32), axis=-1)
    logpt = jnp.take_along_axis(logp, t[:, None], axis=1)[:, 0]
    pt = jnp.exp(logpt)
    if alpha is not None:
        logpt = logpt * jnp.asarray(alpha, jnp.float32)[t]
    loss = -1.0 * (1.0 - pt) ** gamma * logpt
    return loss.mean() if size_average else loss.sum()


if __name__ == "__main__":
    key = jax.random.PRNGKey(0)
    k1, k2 = jax.random.split(key)

    N, C = 2, 4
    alpha = jnp.linspace(0.25, 1.0, C, dtype=jnp.float32)

    # Case 1: dense path (H*W % 8 == 0), gamma=2, per-class alpha, mean.
    H, W = 16, 16
    logits = jax.random.normal(k1, (N, C, H, W), dtype=jnp.float32)
    targets = jax.random.randint(k2, (N, H, W), 0, C, dtype=jnp.int32)
    loss = jax.block_until_ready(
        focal_loss(logits, targets, gamma=2.0, alpha=alpha, size_average=True))
    ref = _reference_focal_loss(logits, targets, gamma=2.0, alpha=alpha,
                                size_average=True)
    assert jnp.allclose(loss, ref, rtol=2e-5, atol=1e-6), (loss, ref)

    # Case 2: ragged fallback (H*W=81, not a multiple of 8), gamma=0, no alpha, sum.
    H2, W2 = 9, 9
    logits2 = jax.random.normal(k1, (N, C, H2, W2), dtype=jnp.float32)
    targets2 = jax.random.randint(k2, (N, H2, W2), 0, C, dtype=jnp.int32)
    loss2 = jax.block_until_ready(
        focal_loss(logits2, targets2, gamma=0.0, alpha=None, size_average=False))
    ref2 = _reference_focal_loss(logits2, targets2, gamma=0.0, alpha=None,
                                 size_average=False)
    assert jnp.allclose(loss2, ref2, rtol=2e-5, atol=1e-5), (loss2, ref2)

    # Case 3: multi-tile + second parallel pixel-chunk axis + phantom-tile clamp
    # (num_j = 3 is odd), dense layout, gamma=2, alpha, mean.
    H3, W3 = 48, 48
    logits3 = jax.random.normal(k1, (N, C, H3, W3), dtype=jnp.float32)
    targets3 = jax.random.randint(k2, (N, H3, W3), 0, C, dtype=jnp.int32)
    loss3 = jax.block_until_ready(
        focal_loss(logits3, targets3, gamma=2.0, alpha=alpha, size_average=True,
                   tile_pixels=1024))
    ref3 = _reference_focal_loss(logits3, targets3, gamma=2.0, alpha=alpha,
                                 size_average=True)
    assert jnp.allclose(loss3, ref3, rtol=2e-5, atol=1e-6), (loss3, ref3)

    # Case 4: 2-D input path, non-integer gamma, multi-tile ragged fallback, sum.
    R = 300
    logits4 = jax.random.normal(k1, (R, C), dtype=jnp.float32)
    targets4 = jax.random.randint(k2, (R,), 0, C, dtype=jnp.int32)
    loss4 = jax.block_until_ready(
        focal_loss(logits4, targets4, gamma=1.5, alpha=None, size_average=False,
                   tile_pixels=128))
    ref4 = _reference_focal_loss(logits4, targets4, gamma=1.5, alpha=None,
                                 size_average=False)
    assert jnp.allclose(loss4, ref4, rtol=2e-5, atol=1e-4), (loss4, ref4)

    print("KERNEL_OK")
</pallas_src>

<mosaic_0001>
module attributes {stable_mosaic.version = 11 : i64} {
  func.func @_focal_loss_kernel(%arg0: i32, %arg1: i32, %arg2: i32, %arg3: memref<1x4x8x128xf32, #tpu.memory_space<vmem>>, %arg4: memref<1x1x8x128xi32, #tpu.memory_space<vmem>>, %arg5: memref<4x1x1xf32, #tpu.memory_space<vmem>>, %arg6: memref<1x1x8x128xf32, #tpu.memory_space<vmem>>) attributes {dimension_semantics = [#tpu.dimension_semantics<parallel>, #tpu.dimension_semantics<parallel>, #tpu.dimension_semantics<arbitrary>], iteration_bounds = array<i64: 2, 1, 1>, scalar_prefetch = 0 : i64, scratch_operands = 0 : i64, tpu.core_type = #tpu.core_type<tc>, window_params = [{transform_indices = @transform_0, window_bounds = array<i64: 1, 4, 8, 128>}, {transform_indices = @transform_1, window_bounds = array<i64: 1, 1, 8, 128>}, {pipeline_mode = #tpu.pipeline_mode<synchronous>, transform_indices = @transform_2, window_bounds = array<i64: 4, 1, 1>}, {transform_indices = @transform_3, window_bounds = array<i64: 1, 1, 8, 128>}]} {
    %c0_i32 = arith.constant 0 : i32
    %0 = arith.cmpi eq, %arg2, %c0_i32 : i32
    %1 = arith.extui %0 : i1 to i32
    %c0_i32_0 = arith.constant 0 : i32
    %2 = arith.cmpi ne, %1, %c0_i32_0 : i32
    scf.if %2 {
      %cst_29 = arith.constant 0.000000e+00 : f32
      %56 = vector.broadcast %cst_29 : f32 to vector<1x1x8x128xf32>
      %c0_30 = arith.constant 0 : index
      %c0_31 = arith.constant 0 : index
      %c0_32 = arith.constant 0 : index
      %c0_33 = arith.constant 0 : index
      %57 = vector.load %arg6[%c0_30, %c0_31, %c0_32, %c0_33] : memref<1x1x8x128xf32, #tpu.memory_space<vmem>>, vector<1x1x8x128xf32>
      tpu.vector_store %arg6[%c0_30, %c0_31, %c0_32, %c0_33], %56 {strides = array<i32>} : memref<1x1x8x128xf32, #tpu.memory_space<vmem>>, vector<1x1x8x128xf32>,
    } else {
    }
    %c0 = arith.constant 0 : index
    %c0_1 = arith.constant 0 : index
    %c0_2 = arith.constant 0 : index
    %c0_3 = arith.constant 0 : index
    %3 = vector.load %arg3[%c0, %c0_1, %c0_2, %c0_3] : memref<1x4x8x128xf32, #tpu.memory_space<vmem>>, vector<1x4x8x128xf32>
    %4 = vector.shape_cast %3 : vector<1x4x8x128xf32> to vector<4x8x128xf32>
    %c0_4 = arith.constant 0 : index
    %c0_5 = arith.constant 0 : index
    %c0_6 = arith.constant 0 : index
    %c0_7 = arith.constant 0 : index
    %5 = vector.load %arg4[%c0_4, %c0_5, %c0_6, %c0_7] : memref<1x1x8x128xi32, #tpu.memory_space<vmem>>, vector<1x1x8x128xi32>
    %6 = vector.shape_cast %5 : vector<1x1x8x128xi32> to vector<1x8x128xi32>
    %cst = arith.constant dense<0xFF800000> : vector<8x128xf32>
    %7 = vector.multi_reduction <maximumf>, %4, %cst [0] : vector<4x8x128xf32> to vector<8x128xf32>
    %8 = vector.shape_cast %7 : vector<8x128xf32> to vector<1x8x128xf32>
    %9 = vector.broadcast %8 : vector<1x8x128xf32> to vector<4x8x128xf32>
    %10 = arith.subf %4, %9 : vector<4x8x128xf32>
    %11 = math.exp %10 : vector<4x8x128xf32>
    %cst_8 = arith.constant dense<0.000000e+00> : vector<8x128xf32>
    %12 = vector.multi_reduction <add>, %11, %cst_8 [0] : vector<4x8x128xf32> to vector<8x128xf32>
    %13 = vector.shape_cast %12 : vector<8x128xf32> to vector<1x8x128xf32>
    %14 = math.log %13 : vector<1x8x128xf32>
    %15 = tpu.iota {dimensions = array<i32: 0>} : vector<4x8x128xi32>
    %16 = vector.broadcast %6 : vector<1x8x128xi32> to vector<4x8x128xi32>
    %17 = arith.cmpi eq, %15, %16 : vector<4x8x128xi32>
    %cst_9 = arith.constant 0.000000e+00 : f32
    %18 = vector.broadcast %cst_9 : f32 to vector<4x8x128xf32>
    %19 = arith.select %17, %10, %18 : vector<4x8x128xi1>, vector<4x8x128xf32>
    %cst_10 = arith.constant dense<0.000000e+00> : vector<8x128xf32>
    %20 = vector.multi_reduction <add>, %19, %cst_10 [0] : vector<4x8x128xf32> to vector<8x128xf32>
    %21 = vector.shape_cast %20 : vector<8x128xf32> to vector<1x8x128xf32>
    %cst_11 = arith.constant 0.000000e+00 : f32
    %22 = vector.broadcast %cst_11 : f32 to vector<4x8x128xf32>
    %23 = arith.select %17, %11, %22 : vector<4x8x128xi1>, vector<4x8x128xf32>
    %cst_12 = arith.constant dense<0.000000e+00> : vector<8x128xf32>
    %24 = vector.multi_reduction <add>, %23, %cst_12 [0] : vector<4x8x128xf32> to vector<8x128xf32>
    %25 = vector.shape_cast %24 : vector<8x128xf32> to vector<1x8x128xf32>
    %26 = arith.subf %21, %14 : vector<1x8x128xf32>
    %27 = arith.divf %25, %13 : vector<1x8x128xf32>
    %c0_13 = arith.constant 0 : index
    %c0_14 = arith.constant 0 : index
    %c0_15 = arith.constant 0 : index
    %28 = vector.load %arg5[%c0_13, %c0_14, %c0_15] : memref<4x1x1xf32, #tpu.memory_space<vmem>>, vector<4x1x1xf32>
    %cst_16 = arith.constant 0.000000e+00 : f32
    %29 = vector.shape_cast %28 : vector<4x1x1xf32> to vector<4x1x1xf32>
    %30 = vector.broadcast %29 : vector<4x1x1xf32> to vector<4x8x128xf32>
    %31 = vector.broadcast %cst_16 : f32 to vector<4x8x128xf32>
    %32 = arith.select %17, %30, %31 : vector<4x8x128xi1>, vector<4x8x128xf32>
    %cst_17 = arith.constant dense<0.000000e+00> : vector<8x128xf32>
    %33 = vector.multi_reduction <add>, %32, %cst_17 [0] : vector<4x8x128xf32> to vector<8x128xf32>
    %34 = vector.shape_cast %33 : vector<8x128xf32> to vector<1x8x128xf32>
    %35 = arith.mulf %26, %34 : vector<1x8x128xf32>
    %cst_18 = arith.constant 1.000000e+00 : f32
    %36 = vector.broadcast %cst_18 : f32 to vector<1x8x128xf32>
    %37 = arith.subf %36, %27 : vector<1x8x128xf32>
    %38 = arith.mulf %37, %37 : vector<1x8x128xf32>
    %39 = arith.mulf %38, %35 : vector<1x8x128xf32>
    %cst_19 = arith.constant 0.000000e+00 : f32
    %40 = vector.broadcast %cst_19 : f32 to vector<1x8x128xf32>
    %41 = arith.subf %40, %39 : vector<1x8x128xf32>
    %c1_i32 = arith.constant 1 : i32
    %42 = arith.muli %arg1, %c1_i32 : i32
    %43 = arith.addi %42, %arg2 : i32
    %c128_i32 = arith.constant 128 : i32
    %44 = arith.muli %43, %c128_i32 : i32
    %45 = tpu.iota {dimensions = array<i32: 2>} : vector<1x8x128xi32>
    %46 = vector.broadcast %44 : i32 to vector<1x8x128xi32>
    %47 = arith.addi %46, %45 : vector<1x8x128xi32>
    %c32_i32 = arith.constant 32 : i32
    %48 = vector.broadcast %c32_i32 : i32 to vector<1x8x128xi32>
    %49 = arith.cmpi slt, %47, %48 : vector<1x8x128xi32>
    %cst_20 = arith.constant 0.000000e+00 : f32
    %50 = vector.broadcast %cst_20 : f32 to vector<1x8x128xf32>
    %51 = arith.select %49, %41, %50 : vector<1x8x128xi1>, vector<1x8x128xf32>
    %c0_21 = arith.constant 0 : index
    %c0_22 = arith.constant 0 : index
    %c0_23 = arith.constant 0 : index
    %c0_24 = arith.constant 0 : index
    %52 = vector.load %arg6[%c0_21, %c0_22, %c0_23, %c0_24] : memref<1x1x8x128xf32, #tpu.memory_space<vmem>>, vector<1x1x8x128xf32>
    %53 = vector.shape_cast %51 : vector<1x8x128xf32> to vector<1x1x8x128xf32>
    %54 = arith.addf %52, %53 : vector<1x1x8x128xf32>
    %c0_25 = arith.constant 0 : index
    %c0_26 = arith.constant 0 : index
    %c0_27 = arith.constant 0 : index
    %c0_28 = arith.constant 0 : index
    %55 = vector.load %arg6[%c0_25, %c0_26, %c0_27, %c0_28] : memref<1x1x8x128xf32, #tpu.memory_space<vmem>>, vector<1x1x8x128xf32>
    tpu.vector_store %arg6[%c0_25, %c0_26, %c0_27, %c0_28], %54 {strides = array<i32>} : memref<1x1x8x128xf32, #tpu.memory_space<vmem>>, vector<1x1x8x128xf32>,
    return
  }
  func.func @transform_0(%arg0: i32, %arg1: i32, %arg2: i32) -> (i32, i32, i32, i32) {
    %c1_i32 = arith.constant 1 : i32
    %0 = arith.muli %arg1, %c1_i32 : i32
    %1 = arith.addi %0, %arg2 : i32
    %c0_i32 = arith.constant 0 : i32
    %2 = arith.minsi %1, %c0_i32 : i32
    %c0_i32_0 = arith.constant 0 : i32
    %c0_i32_1 = arith.constant 0 : i32
    %c0_i32_2 = arith.constant 0 : i32
    return %arg0, %c0_i32_0, %c0_i32_1, %2 : i32, i32, i32, i32
  }
  func.func @transform_1(%arg0: i32, %arg1: i32, %arg2: i32) -> (i32, i32, i32, i32) {
    %c1_i32 = arith.constant 1 : i32
    %0 = arith.muli %arg1, %c1_i32 : i32
    %1 = arith.addi %0, %arg2 : i32
    %c0_i32 = arith.constant 0 : i32
    %2 = arith.minsi %1, %c0_i32 : i32
    %c0_i32_0 = arith.constant 0 : i32
    %c0_i32_1 = arith.constant 0 : i32
    %c0_i32_2 = arith.constant 0 : i32
    return %arg0, %c0_i32_0, %c0_i32_1, %2 : i32, i32, i32, i32
  }
  func.func @transform_2(%arg0: i32, %arg1: i32, %arg2: i32) -> (i32, i32, i32) {
    %c0_i32 = arith.constant 0 : i32
    %c0_i32_0 = arith.constant 0 : i32
    %c0_i32_1 = arith.constant 0 : i32
    %c0_i32_2 = arith.constant 0 : i32
    return %c0_i32, %c0_i32_0, %c0_i32_1 : i32, i32, i32
  }
  func.func @transform_3(%arg0: i32, %arg1: i32, %arg2: i32) -> (i32, i32, i32, i32) {
    %c0_i32 = arith.constant 0 : i32
    %c0_i32_0 = arith.constant 0 : i32
    %c0_i32_1 = arith.constant 0 : i32
    return %arg0, %arg1, %c0_i32, %c0_i32_0 : i32, i32, i32, i32
  }
}

</mosaic_0001>

<llo_original>
// kernel: tpu_custom_call.1
$region0: #{tpu_custom_call.1}
  #allocation0 [shape = 'u32[]', space=smem, size = 0x4, offset = 0x4, fixed_abs, tag = 'smem constant byte address 0x4 - core index']
  #allocation1 [shape = 'u32[144,128]{1,0:T(1,128)}', space=vmem, size = 0x12000, scoped, tag = 'internal scratch']
  %s0 = inlined_call_operand.hbm [shape: f32[2,4,8,32], index: 0, kind: input, shape index: {}]
  %s1 = inlined_call_operand.hbm [shape: s32[2,1,8,32], index: 1, kind: input, shape index: {}]
  %s2 = inlined_call_operand.vmem [shape: f32[4,1,1], index: 2, kind: input, shape index: {}]
  %s3 = inlined_call_operand.hbm [shape: f32[2,1,8,128], index: 3, kind: output, shape index: {}]
  %s4 = sld [smem:[#allocation0]]
  $region57: #{tpu_custom_call.1} parent=0
    _
  %s6 = ssub.s32 1, %s4
  %s7 = scalar_select 0, %s6, %s4
  $region1: #{tpu_custom_call.1} parent=0
    #allocation2 [shape = 'u8[32768]{0}', space=vmem, size = 0x8000, scoped, tag = 'input window, operand 0']
    #allocation3 [shape = 's32[2]{0}', space=sflag, size = 0x8, scoped, tag = 'scoped memory for tpu_custom_call.1']
    #allocation4 [shape = 's32[2]{0}', space=sflag, size = 0x8, scoped, tag = 'scoped memory for tpu_custom_call.1']
    #allocation5 [shape = 'u8[8192]{0}', space=vmem, size = 0x2000, scoped, tag = 'input window, operand 1']
    #allocation6 [shape = 's32[2]{0}', space=sflag, size = 0x8, scoped, tag = 'scoped memory for tpu_custom_call.1']
    #allocation7 [shape = 'u8[8192]{0}', space=vmem, size = 0x2000, scoped, tag = 'output window, operand 0']
    %8 = vsyncpa [#allocation3], 0
    %s9 = scalar_lea.sflag [#allocation3], 1
    %10 = vsyncpa %s9, 0
    %11 = vsyncpa [#allocation6], 0
    %s12 = scalar_lea.sflag [#allocation6], 1
    %13 = vsyncpa %s12, 0
    %14 = vsyncpa [#allocation4], 0
    %s15 = scalar_lea.sflag [#allocation4], 1
    %16 = vsyncpa %s15, 0
    loop: start=0, step=1, limit=4
    $region2: #{tpu_custom_call.1} parent=1 // loop_pre_header
      _
    $region3: #{tpu_custom_call.1} parent=1 // loop_header
      %s18 = sphi 0, %s22
      %p19 = scmp.ge.s32.totalorder %s18, 4
      %s25 = sphi 0, %s44
      %s26 = sphi 0, %s40
      %s27 = sphi 0, %s36
      %s28 = sphi 0, %s25
      %s29 = sphi 0, %s26
      %s30 = sphi 0, %s27
      %s31 = sphi 0, %s28
      %s32 = sphi 0, %s29
      %s33 = sphi 0, %s30
      %s55 = sphi 0, %s57
      %s58 = sphi 0, %s55
      %s59 = sphi 0, %s58
      %s75 = sphi 0, %s59
      %s89 = sphi 0, %s91
      %s92 = sphi 0, %s89
      %s93 = sphi 0, %s92
      %s109 = sphi 0, %s93
      %s113 = sphi 0, %s113
      %s115 = sphi 0, %s113
      %s116 = sphi 0, %s115
      %s130 = sphi 0, %s116
      %s138 = sphi 0, %s140
      %s141 = sphi 0, %s138
      %s142 = sphi 0, %s141
      %s158 = sphi 0, %s142
    $region4: #{tpu_custom_call.1} parent=1 // loop_header_branch
      %21 = sbr.rel (%p19) target = $region8
    $region5: #{tpu_custom_call.1} parent=1 // loop_body
      %s23 = ssub.s32 %s18, 1
      %s24 = ssub.s32 %s18, 2
      %s34 = sadd.s32 1, %s27
      %p35 = scmp.ge.s32.totalorder %s34, 1
      %s36 = scalar_select %p35, 0, %s34
      %s37 = sadd.s32 1, %s26
      %s38 = scalar_select %p35, %s37, %s26
      %p39 = scmp.ge.s32.totalorder %s38, 1
      %s40 = scalar_select %p39, 0, %s38
      %s41 = sadd.s32 1, %s25
      %s42 = scalar_select %p39, %s41, %s25
      %p43 = scmp.ge.s32.totalorder %s42, 2
      %s44 = scalar_select %p43, 0, %s42
      %s45 = sadd.s32 %s26, %s27
      %p46 = scmp.lt.s32.totalorder %s45, 0
      %s47 = scalar_select %p46, %s45, 0
      %s48 = sadd.s32 %s40, %s36
      %p49 = scmp.lt.s32.totalorder %s48, 0
      %s50 = scalar_select %p49, %s48, 0
      %s51 = ssub.s32 %s25, %s44
      %s52 = ssub.s32 %s47, %s50
      %s53 = sor.u32 %s51, %s52
      %p54 = scmp.eq.s32.totalorder %s53, 0
      %s56 = sadd.s32 %s55, 1
      %s57 = scalar_select %p54, %s55, %s56
      %p60 = pneg %p54
      %p61 = scmp.eq.s32.totalorder %s18, 1
      %p62 = por %p60, %p61
      %p63 = scmp.ne.s32.totalorder %s55, %s58
      %p64 = scmp.eq.s32.totalorder %s18, 0
      %p65 = por %p63, %p64
      %p66 = scmp.ne.s32.totalorder %s55, %s58
      %p67 = scmp.eq.s32.totalorder %s23, 1
      %p68 = por %p66, %p67
      %p69 = scmp.ne.s32.totalorder %s58, %s59
      %p70 = scmp.eq.s32.totalorder %s23, 0
      %p71 = por %p69, %p70
      %p72 = scmp.ne.s32.totalorder %s58, %s59
      %p73 = scmp.eq.s32.totalorder %s24, 1
      %p74 = por %p72, %p73
      %p76 = scmp.ne.s32.totalorder %s59, %s75
      %p77 = scmp.eq.s32.totalorder %s24, 0
      %p78 = por %p76, %p77
      %s79 = sadd.s32 %s26, %s27
      %p80 = scmp.lt.s32.totalorder %s79, 0
      %s81 = scalar_select %p80, %s79, 0
      %s82 = sadd.s32 %s40, %s36
      %p83 = scmp.lt.s32.totalorder %s82, 0
      %s84 = scalar_select %p83, %s82, 0
      %s85 = ssub.s32 %s25, %s44
      %s86 = ssub.s32 %s81, %s84
      %s87 = sor.u32 %s85, %s86
      %p88 = scmp.eq.s32.totalorder %s87, 0
      %s90 = sadd.s32 %s89, 1
      %s91 = scalar_select %p88, %s89, %s90
      %p94 = pneg %p88
      %p95 = scmp.eq.s32.totalorder %s18, 1
      %p96 = por %p94, %p95
      %p97 = scmp.ne.s32.totalorder %s89, %s92
      %p98 = scmp.eq.s32.totalorder %s18, 0
      %p99 = por %p97, %p98
      %p100 = scmp.ne.s32.totalorder %s89, %s92
      %p101 = scmp.eq.s32.totalorder %s23, 1
      %p102 = por %p100, %p101
      %p103 = scmp.ne.s32.totalorder %s92, %s93
      %p104 = scmp.eq.s32.totalorder %s23, 0
      %p105 = por %p103, %p104
      %p106 = scmp.ne.s32.totalorder %s92, %s93
      %p107 = scmp.eq.s32.totalorder %s24, 1
      %p108 = por %p106, %p107
      %p110 = scmp.ne.s32.totalorder %s93, %s109
      %p111 = scmp.eq.s32.totalorder %s24, 0
      %p112 = por %p110, %p111
      %s114 = sadd.s32 %s113, 1
      %p117 = scmp.eq.s32.totalorder %s18, 1
      %p118 = scmp.ne.s32.totalorder %s113, %s115
      %p119 = scmp.eq.s32.totalorder %s18, 0
      %p120 = por %p118, %p119
      %p121 = scmp.ne.s32.totalorder %s113, %s115
      %p122 = scmp.eq.s32.totalorder %s23, 1
      %p123 = por %p121, %p122
      %p124 = scmp.ne.s32.totalorder %s115, %s116
      %p125 = scmp.eq.s32.totalorder %s23, 0
      %p126 = por %p124, %p125
      %p127 = scmp.ne.s32.totalorder %s115, %s116
      %p128 = scmp.eq.s32.totalorder %s24, 1
      %p129 = por %p127, %p128
      %p131 = scmp.ne.s32.totalorder %s116, %s130
      %p132 = scmp.eq.s32.totalorder %s24, 0
      %p133 = por %p131, %p132
      %s134 = ssub.s32 %s25, %s44
      %s135 = ssub.s32 %s26, %s40
      %s136 = sor.u32 %s134, %s135
      %p137 = scmp.eq.s32.totalorder %s136, 0
      %s139 = sadd.s32 %s138, 1
      %s140 = scalar_select %p137, %s138, %s139
      %p143 = pneg %p137
      %p144 = scmp.eq.s32.totalorder %s18, 1
      %p145 = por %p143, %p144
      %p146 = scmp.ne.s32.totalorder %s138, %s141
      %p147 = scmp.eq.s32.totalorder %s18, 0
      %p148 = por %p146, %p147
      %p149 = scmp.ne.s32.totalorder %s138, %s141
      %p150 = scmp.eq.s32.totalorder %s23, 1
      %p151 = por %p149, %p150
      %p152 = scmp.ne.s32.totalorder %s141, %s142
      %p153 = scmp.eq.s32.totalorder %s23, 0
      %p154 = por %p152, %p153
      %p155 = scmp.ne.s32.totalorder %s141, %s142
      %p156 = scmp.eq.s32.totalorder %s24, 1
      %p157 = por %p155, %p156
      %p159 = scmp.ne.s32.totalorder %s142, %s158
      %p160 = scmp.eq.s32.totalorder %s24, 0
      %p161 = por %p159, %p160
      %p162 = scmp.le.s32.totalorder 1, %s18
      %p163 = scmp.lt.s32.totalorder %s18, 3
      %p164 = pnand %p162, %p163
      %p165 = pneg %p164
      // Predicated region
      $region9: #{tpu_custom_call.1} parent=5 // pred_check
        _
      $region10: #{tpu_custom_call.1} parent=5 // pred_check_branch
        %167 = sbr.rel (%p164) target = $region12
      $region11: #{tpu_custom_call.1} parent=5 // pred_region
        %s168 = ssub.s32 %s18, 1
        // Predicated region
        $region13: #{tpu_custom_call.1} parent=11 // pred_check
          %p169 = pneg %p126
        $region14: #{tpu_custom_call.1} parent=11 // pred_check_branch
          %171 = sbr.rel (%p169) target = $region16
        $region15: #{tpu_custom_call.1} parent=11 // pred_region
          _
        $region16: #{tpu_custom_call.1} parent=11 // pred_fallthru
          _
      $region12: #{tpu_custom_call.1} parent=5 // pred_fallthru
        _
      %p172 = scmp.lt.s32.totalorder %s18, 2
      // Predicated region
      $region17: #{tpu_custom_call.1} parent=5 // pred_check
        %p173 = pneg %p172
      $region18: #{tpu_custom_call.1} parent=5 // pred_check_branch
        %175 = sbr.rel (%p173) target = $region20
      $region19: #{tpu_custom_call.1} parent=5 // pred_region
        // Predicated region
        $region21: #{tpu_custom_call.1} parent=19 // pred_check
          %p176 = pneg %p65
        $region22: #{tpu_custom_call.1} parent=19 // pred_check_branch
          %178 = sbr.rel (%p176) target = $region24
        $region23: #{tpu_custom_call.1} parent=19 // pred_region
          %s179 = sand.u32 %s55, 1
          %s180 = scalar_lea.sflag [#allocation3], %s179
          %s181 = sand.u32 %s55, 1
          %s182 = smul.addr %s181, 32
          %s183 = scalar_lea.vmem [#allocation2], %s182
          %s184 = sadd.s32 %s26, %s27
          %p185 = scmp.lt.s32.totalorder %s184, 0
          %s186 = scalar_select %p185, %s184, 0
          %s188 = ssub.s32 512, 512
          %189 = vsyncadd %s180, %s188
          %s190 = smul.addr %s25, 4
          %s191 = sadd.s32 %s186, %s190
          %s192 = smul.addr %s191, 128
          %s193 = scalar_lea.hbm %s0, %s192
          %s194 = sshll.u32 %s183, 4
          %s195 = int_to_ptr.vmem [resolvable:$true] %s194
          %200 = dma.hbm_to_vmem [thread:$0]  %s193, 512, %s195, %s180, 128, 128, 8
        $region24: #{tpu_custom_call.1} parent=19 // pred_fallthru
          _
        // Predicated region
        $region25: #{tpu_custom_call.1} parent=19 // pred_check
          %p201 = pneg %p99
        $region26: #{tpu_custom_call.1} parent=19 // pred_check_branch
          %203 = sbr.rel (%p201) target = $region28
        $region27: #{tpu_custom_call.1} parent=19 // pred_region
          %s204 = sand.u32 %s89, 1
          %s205 = scalar_lea.sflag [#allocation6], %s204
          %s206 = sand.u32 %s89, 1
          %s207 = smul.addr %s206, 8
          %s208 = scalar_lea.vmem [#allocation5], %s207
          %s209 = sadd.s32 %s26, %s27
          %p210 = scmp.lt.s32.totalorder %s209, 0
          %s211 = scalar_select %p210, %s209, 0
          %s213 = ssub.s32 128, 128
          %214 = vsyncadd %s205, %s213
          %s215 = sadd.s32 %s211, %s25
          %s216 = smul.addr %s215, 128
          %s217 = scalar_lea.hbm %s1, %s216
          %s219 = sshll.u32 %s208, 4
          %s220 = int_to_ptr.vmem [resolvable:$true] %s219
          %222 = dma.hbm_to_vmem [thread:$0]  %s217, 128, %s220, %s205
        $region28: #{tpu_custom_call.1} parent=19 // pred_fallthru
          _
      $region20: #{tpu_custom_call.1} parent=5 // pred_fallthru
        _
      %p223 = scmp.le.s32.totalorder 1, %s18
      %p224 = scmp.lt.s32.totalorder %s18, 3
      %p225 = pnand %p223, %p224
      %p226 = pneg %p225
      // Predicated region
      $region29: #{tpu_custom_call.1} parent=5 // pred_check
        _
      $region30: #{tpu_custom_call.1} parent=5 // pred_check_branch
        %228 = sbr.rel (%p225) target = $region32
      $region31: #{tpu_custom_call.1} parent=5 // pred_region
        %s229 = ssub.s32 %s18, 1
        %s230 = sand.u32 %s58, 1
        %s231 = scalar_lea.sflag [#allocation3], %s230
        %s232 = sand.u32 %s58, 1
        %s233 = smul.addr %s232, 32
        %s234 = scalar_lea.vmem [#allocation2], %s233
        // Predicated region
        $region33: #{tpu_custom_call.1} parent=31 // pred_check
          %p235 = pneg %p71
        $region34: #{tpu_custom_call.1} parent=31 // pred_check_branch
          %237 = sbr.rel (%p235) target = $region36
        $region35: #{tpu_custom_call.1} parent=31 // pred_region
          %238 = dma.done %s231, 512
        $region36: #{tpu_custom_call.1} parent=31 // pred_fallthru
          _
        %s239 = sand.u32 %s92, 1
        %s240 = scalar_lea.sflag [#allocation6], %s239
        %s241 = sand.u32 %s92, 1
        %s242 = smul.addr %s241, 8
        %s243 = scalar_lea.vmem [#allocation5], %s242
        // Predicated region
        $region37: #{tpu_custom_call.1} parent=31 // pred_check
          %p244 = pneg %p105
        $region38: #{tpu_custom_call.1} parent=31 // pred_check_branch
          %246 = sbr.rel (%p244) target = $region40
        $region39: #{tpu_custom_call.1} parent=31 // pred_region
          %247 = dma.done %s240, 128
        $region40: #{tpu_custom_call.1} parent=31 // pred_fallthru
          _
        %s248 = sand.u32 %s58, 1
        %s249 = scalar_lea.sflag [#allocation3], %s248
        %s250 = sand.u32 %s58, 1
        %s251 = smul.addr %s250, 32
        %s252 = scalar_lea.vmem [#allocation2], %s251
        %p253 = pneg %p71
        %p254 = pneg %p68
        %s255 = sand.u32 %s92, 1
        %s256 = scalar_lea.sflag [#allocation6], %s255
        %s257 = sand.u32 %s92, 1
        %s258 = smul.addr %s257, 8
        %s259 = scalar_lea.vmem [#allocation5], %s258
        %p260 = pneg %p105
        %p261 = pneg %p102
        %p262 = pneg %p126
        %p263 = pneg %p123
        %p264 = pneg %p154
        %p265 = pneg %p151
        %s266 = sand.u32 %s141, 1
        %s267 = scalar_lea.sflag [#allocation4], %s266
        %s268 = sand.u32 %s141, 1
        %s269 = smul.addr %s268, 8
        %s270 = scalar_lea.vmem [#allocation7], %s269
        %s271 = sadd.s32 %s29, %s30
        %p272 = scmp.lt.s32.totalorder %s271, 0
        %s273 = scalar_select %p272, %s271, 0
        %s274 = sadd.s32 %s29, %s30
        %p275 = scmp.lt.s32.totalorder %s274, 0
        %s276 = scalar_select %p275, %s274, 0
        %p277 = scmp.eq.s32.totalorder %s30, 0
        // Predicated region
        $region41: #{tpu_custom_call.1} parent=31 // pred_check
          %p278 = pneg %p277
        $region42: #{tpu_custom_call.1} parent=31 // pred_check_branch
          %280 = sbr.rel (%p278) target = $region44
        $region43: #{tpu_custom_call.1} parent=31 // pred_region
          %281 = vst [vmem:[%s270] sm:$0xff] 0.0
        $region44: #{tpu_custom_call.1} parent=31 // pred_fallthru
          _
        %v282 = vld [vmem:[%s234] sm:$0xff]
        %v283 = vld [vmem:[%s234 + $0x8] sm:$0xff]
        %v284 = vld [vmem:[%s234 + $0x10] sm:$0xff]
        %v285 = vld [vmem:[%s234 + $0x18] sm:$0xff]
        %v286 = vld [vmem:[%s243] sm:$0xff]
        %v287 = vmax.f32 %v282, %v283
        %v288 = vmax.f32 %v284, %v285
        %v289 = vmax.f32 %v287, %v288
        %v290 = vsub.f32 %v282, %v289
        %v291 = vsub.f32 %v283, %v289
        %v292 = vsub.f32 %v284, %v289
        %v293 = vsub.f32 %v285, %v289
        %v294 = vmul.f32 %v290, 1.442695
        %v295 = vpow.pop %v294
        %v296 = vmul.f32 %v291, 1.442695
        %v297 = vpow.pop %v296
        %v298 = vmul.f32 %v292, 1.442695
        %v299 = vpow.pop %v298
        %v300 = vmul.f32 %v293, 1.442695
        %v301 = vpow.pop %v300
        %v302 = vadd.f32 %v295, %v297
        %v303 = vadd.f32 %v302, %v299
        %v304 = vadd.f32 %v303, %v301
        %v305 = vlog2.pop %v304
        %v306 = vmul.f32 %v305, 0.6931472
        %vm307 = vcmp.eq.s32.totalorder %v286, 0
        %vm308 = vcmp.eq.s32.totalorder %v286, 1
        %vm309 = vcmp.eq.s32.totalorder %v286, 2
        %vm310 = vcmp.eq.s32.totalorder %v286, 3
        %v311 = vsel %vm307, %v290, 0.0
        %v312 = vsel %vm308, %v291, 0.0
        %v313 = vsel %vm309, %v292, 0.0
        %v314 = vsel %vm310, %v293, 0.0
        %v315 = vadd.f32 %v311, %v312
        %v316 = vadd.f32 %v315, %v313
        %v317 = vadd.f32 %v316, %v314
        %v318 = vsel %vm307, %v295, 0.0
        %v319 = vsel %vm308, %v297, 0.0
        %v320 = vsel %vm309, %v299, 0.0
        %v321 = vsel %vm310, %v301, 0.0
        %v322 = vadd.f32 %v318, %v319
        %v323 = vadd.f32 %v322, %v320
        %v324 = vadd.f32 %v323, %v321
        %v325 = vsub.f32 %v317, %v306
        %v326 = vrcp.pop %v304
        %v327 = vmul.f32 %v324, %v326
        %v328 = vld [vmem:[%s2] sm:$0x1]
        %v329 = vld [vmem:[%s2 + $0x1] sm:$0x1]
        %v330 = vld [vmem:[%s2 + $0x2] sm:$0x1]
        %v331 = vld [vmem:[%s2 + $0x3] sm:$0x1]
        %v336 = vlaneseq
        %v337 = vshrl.u32 %v336, 7
        %v338 = vsub.s32 0, %v337
        %v339 = vrot.slane %v328, %v338
        %v340 = vlaneseq
        %v341 = vshrl.u32 %v340, 7
        %v342 = vsub.s32 0, %v341
        %v343 = vrot.slane %v329, %v342
        %v344 = vlaneseq
        %v345 = vshrl.u32 %v344, 7
        %v346 = vsub.s32 0, %v345
        %v347 = vrot.slane %v330, %v346
        %v348 = vlaneseq
        %v349 = vshrl.u32 %v348, 7
        %v350 = vsub.s32 0, %v349
        %v351 = vrot.slane %v331, %v350
        %352 = vset.pattern.permute.xlu0 0
        %353 = vperm.xlu0 %352, %v339
        %v354 = vpop.permute.xlu0 %353
        %356 = vset.pattern.permute.xlu0 0
        %357 = vperm.xlu0 %356, %v343
        %v358 = vpop.permute.xlu0 %357
        %360 = vset.pattern.permute.xlu0 0
        %361 = vperm.xlu0 %360, %v347
        %v362 = vpop.permute.xlu0 %361
        %364 = vset.pattern.permute.xlu0 0
        %365 = vperm.xlu0 %364, %v351
        %v366 = vpop.permute.xlu0 %365
        %v368 = vsel %vm307, %v354, 0.0
        %v369 = vsel %vm308, %v358, 0.0
        %v370 = vsel %vm309, %v362, 0.0
        %v371 = vsel %vm310, %v366, 0.0
        %v372 = vadd.f32 %v368, %v369
        %v373 = vadd.f32 %v372, %v370
        %v374 = vadd.f32 %v373, %v371
        %v375 = vmul.f32 %v325, %v374
        %v376 = vsub.f32 1.0, %v327
        %v377 = vmul.f32 %v376, %v376
        %v378 = vmul.f32 %v377, %v375
        %v379 = vsub.f32 0.0, %v378
        %s380 = sadd.s32 %s29, %s30
        %s381 = smul.u32 %s380, 128
        %v382 = vlaneseq
        %v383 = vand.u32 %v382, 127
        %v384 = vstv %s381
        %v385 = vadd.s32 %v384, %v383
        %vm386 = vcmp.lt.s32.totalorder %v385, 32
        %v387 = vsel %vm386, %v379, 0.0
        %v388 = vld [vmem:[%s270] sm:$0xff]
        %v389 = vadd.f32 %v388, %v387
        %390 = vst [vmem:[%s270] sm:$0xff] %v389
        %s391 = sand.u32 %s141, 1
        %s392 = scalar_lea.sflag [#allocation4], %s391
        %s393 = sand.u32 %s141, 1
        %s394 = smul.addr %s393, 8
        %s395 = scalar_lea.vmem [#allocation7], %s394
        // Predicated region
        $region45: #{tpu_custom_call.1} parent=31 // pred_check
          %p396 = pneg %p151
        $region46: #{tpu_custom_call.1} parent=31 // pred_check_branch
          %398 = sbr.rel (%p396) target = $region48
        $region47: #{tpu_custom_call.1} parent=31 // pred_region
          %s400 = ssub.s32 128, 128
          %401 = vsyncadd %s392, %s400
          %s402 = sadd.s32 %s29, %s28
          %s403 = smul.addr %s402, 128
          %s404 = scalar_lea.hbm %s3, %s403
          %s406 = sshll.u32 %s395, 4
          %s407 = int_to_ptr.vmem [resolvable:$true] %s406
          %409 = dma.vmem_to_hbm [thread:$0]  %s407, 128, %s404, %s392
        $region48: #{tpu_custom_call.1} parent=31 // pred_fallthru
          _
      $region32: #{tpu_custom_call.1} parent=5 // pred_fallthru
        _
      %p410 = scmp.le.s32.totalorder 2, %s18
      // Predicated region
      $region49: #{tpu_custom_call.1} parent=5 // pred_check
        %p411 = pneg %p410
      $region50: #{tpu_custom_call.1} parent=5 // pred_check_branch
        %413 = sbr.rel (%p411) target = $region52
      $region51: #{tpu_custom_call.1} parent=5 // pred_region
        %s414 = ssub.s32 %s18, 2
        // Predicated region
        $region53: #{tpu_custom_call.1} parent=51 // pred_check
          %p415 = pneg %p157
        $region54: #{tpu_custom_call.1} parent=51 // pred_check_branch
          %417 = sbr.rel (%p415) target = $region56
        $region55: #{tpu_custom_call.1} parent=51 // pred_region
          %s418 = sand.u32 %s142, 1
          %s419 = scalar_lea.sflag [#allocation4], %s418
          %s420 = sand.u32 %s142, 1
          %s421 = smul.addr %s420, 8
          %s422 = scalar_lea.vmem [#allocation7], %s421
          %423 = dma.done %s419, 128
        $region56: #{tpu_custom_call.1} parent=51 // pred_fallthru
          _
      $region52: #{tpu_custom_call.1} parent=5 // pred_fallthru
        _
    $region6: #{tpu_custom_call.1} parent=1 // loop_footer
      %s22 = sadd.s32 1, %s18
    $region7: #{tpu_custom_call.1} parent=1 // loop_footer_branch
      %17 = sbr.rel target = $region3
    $region8: #{tpu_custom_call.1} parent=1 // loop_exit
      _
    %424 = vsyncpa [#allocation3], 1
    %s425 = scalar_lea.sflag [#allocation3], 1
    %426 = vsyncpa %s425, 1
    %427 = vsyncpa [#allocation6], 1
    %s428 = scalar_lea.sflag [#allocation6], 1
    %429 = vsyncpa %s428, 1
    %430 = vsyncpa [#allocation4], 1
    %s431 = scalar_lea.sflag [#allocation4], 1
    %432 = vsyncpa %s431, 1

</llo_original>
